<compile_context>
chip_gen: v7x
topology: tpu7x:2x2x1
jax: 0.10.0
libtpu: 0.0.40
codegen_flags: <defaults>
</compile_context>

<pallas_src>
import functools
import math

import jax
import jax.numpy as jnp
from jax import lax
from jax.experimental import pallas as pl
from jax.experimental.pallas import tpu as pltpu

_NEG_BIG = -1e30  # finite "minus infinity" (avoids inf-inf NaNs under masking)


def _make_compress_kernel(shift: float, k_total: int, tile_k: int):
    """shift = 1/T: fixed numerical-stability offset (cancels in the KL)."""
    ragged = (k_total % tile_k) != 0

    def kernel(t_ref, s_ref, tmem_ref, smem_ref, kl_ref, z_t, a_t, z_s):
        k = pl.program_id(1)
        nk = pl.num_programs(1)

        @pl.when(k == 0)
        def _init():
            z_t[...] = jnp.zeros_like(z_t)
            a_t[...] = jnp.zeros_like(a_t)
            z_s[...] = jnp.zeros_like(z_s)

        # Similarities for this K tile: [tile_b, tile_k].  1/T is already
        # folded into the feature operands; banks stay in storage dtype.
        contract = (((1,), (1,)), ((), ()))  # contract the feature dim
        sim_t = lax.dot_general(t_ref[...], tmem_ref[...], contract,
                                preferred_element_type=jnp.float32)
        sim_s = lax.dot_general(s_ref[...], smem_ref[...], contract,
                                preferred_element_type=jnp.float32)

        def accumulate(st, ss):
            # Fixed shift instead of a running max: |sim| <= sqrt(3)/T for the
            # random-uniform bank init (<= 1/T once rows are normalized feats),
            # so exp(st - shift) <= exp(0.74/T) ~ 9e7: safely inside f32.
            e_t = jnp.exp(st - shift)
            e_s = jnp.exp(ss - shift)
            z_t[...] += jnp.sum(e_t, axis=1, keepdims=True)
            a_t[...] += jnp.sum(e_t * (st - ss), axis=1, keepdims=True)
            z_s[...] += jnp.sum(e_s, axis=1, keepdims=True)

        if ragged:
            # Hot path: no masking on full tiles.
            @pl.when(k < nk - 1)
            def _hot():
                accumulate(sim_t, sim_s)

            # Only the final (partial) tile pays the column mask.
            @pl.when(k == nk - 1)
            def _last():
                col = k * tile_k + lax.broadcasted_iota(jnp.int32, (1, tile_k), 1)
                valid = col < k_total
                accumulate(jnp.where(valid, sim_t, _NEG_BIG),
                           jnp.where(valid, sim_s, _NEG_BIG))
        else:
            accumulate(sim_t, sim_s)

        @pl.when(k == nk - 1)
        def _finalize():
            # row KL = sum_k p_k (log p_k - log q_k)
            #        = A / Z_t - log Z_t + log Z_s   (the shift cancels)
            kl_ref[...] = (a_t[...] / z_t[...]
                           - jnp.log(z_t[...]) + jnp.log(z_s[...]))

    return kernel


def _l2_normalize(x):
    # Normalize(power=2): x / sqrt(sum(x^2, dim=1)) — f32 math, EUP rsqrt.
    x32 = x.astype(jnp.float32)
    return x32 * lax.rsqrt(jnp.sum(x32 * x32, axis=1, keepdims=True))


def _default_tile_k(k_total, d_t, d_s, bank_itemsize, tile_b):
    # Budget counts the double-buffered bank DMA slabs AND the f32
    # [tile_b, tile_k] sim/exp/diff chain, keeping well under a 48 MiB scoped
    # VMEM limit (safe on v7x's 64 MiB; v5e/v6e have more physical VMEM).
    budget = 40 * 1024 * 1024
    per_k = 2 * (d_t + d_s) * bank_itemsize + 6 * tile_b * 4
    tk = budget // per_k
    tk = min(tk, 4096)                 # keep per-step DMA / intermediates sane
    if tk >= k_total:
        return int(k_total)            # single pass over the queue
    return int(max(128, (tk // 128) * 128))   # lane-aligned, keeps nk small


def _vmem_limit_bytes(tile_b, tile_k, d_t, d_s, feat_item, bank_item):
    lane = lambda d: max(d, 128)       # lanes pad to 128
    need = 2 * tile_b * (lane(d_t) + lane(d_s)) * feat_item      # features x2 buf
    need += 2 * tile_k * (lane(d_t) + lane(d_s)) * bank_item     # bank tiles x2 buf
    need += (2 + 3) * tile_b * 128 * 4                           # output + 3 accumulators
    need += 6 * tile_b * lane(tile_k) * 4                        # f32 sim/exp chain
    need = int(need * 1.25) + (1 << 20)
    return min(max(need, 32 * 1024 * 1024), 48 * 1024 * 1024)


@functools.partial(
    jax.jit,
    static_argnames=("T", "index", "tile_k", "tile_b", "batch_tiles"),
    donate_argnames=("teacher_memory", "student_memory"))
def compress_momentum_forward(teacher_feats, student_feats, student_feats_key,
                              teacher_memory, student_memory,
                              *, T=0.04, index=0, tile_k=None, tile_b=None,
                              batch_tiles=1):
    """CompReSSMomentum forward.

    Returns (loss, new_teacher_mem, new_student_mem, new_index).
    batch_tiles=1 streams each bank from HBM exactly once (best on v5e/v6e);
    batch_tiles=2 shards the parallel batch axis across both v7x TensorCores.
    """
    B = teacher_feats.shape[0]
    Kq, Dt = teacher_memory.shape
    Ds = student_memory.shape[1]
    inv_t = 1.0 / float(T)

    # l2norm of all three feature tensors (as in the PyTorch module).
    t_n = _l2_normalize(teacher_feats)
    s_n = _l2_normalize(student_feats)
    sk_n = _l2_normalize(student_feats_key)

    # Fold 1/T into the matmul operands (O(B*D) work) and feed them in the
    # banks' storage dtype (bf16-ready path).
    t_in = (t_n * inv_t).astype(teacher_memory.dtype)
    s_in = (s_n * inv_t).astype(student_memory.dtype)

    if tile_b is None:
        tile_b = B
        if batch_tiles > 1 and B % batch_tiles == 0 and (B // batch_tiles) % 8 == 0:
            tile_b = B // batch_tiles
    assert B % tile_b == 0, "tile_b must divide the batch size"

    if tile_k is None:
        tile_k = _default_tile_k(Kq, Dt, Ds, teacher_memory.dtype.itemsize, tile_b)
    tile_k = min(int(tile_k), Kq)
    if tile_k < Kq:
        tile_k = max(8, (tile_k // 8) * 8)   # sublane-aligned block rows

    nb = B // tile_b
    nk = pl.cdiv(Kq, tile_k)

    kernel = _make_compress_kernel(inv_t, Kq, tile_k)
    kl_rows = pl.pallas_call(
        kernel,
        out_shape=jax.ShapeDtypeStruct((B, 1), jnp.float32),
        grid=(nb, nk),
        in_specs=[
            pl.BlockSpec((tile_b, Dt), lambda b, k: (b, 0)),
            pl.BlockSpec((tile_b, Ds), lambda b, k: (b, 0)),
            pl.BlockSpec((tile_k, Dt), lambda b, k: (k, 0)),
            pl.BlockSpec((tile_k, Ds), lambda b, k: (k, 0)),
        ],
        out_specs=pl.BlockSpec((tile_b, 1), lambda b, k: (b, 0)),
        scratch_shapes=[pltpu.VMEM((tile_b, 1), jnp.float32) for _ in range(3)],
        compiler_params=pltpu.CompilerParams(
            dimension_semantics=("parallel", "arbitrary"),
            vmem_limit_bytes=_vmem_limit_bytes(
                tile_b, tile_k, Dt, Ds,
                t_in.dtype.itemsize, teacher_memory.dtype.itemsize),
        ),
    )(t_in, s_in, teacher_memory, student_memory)

    # F.kl_div(log_softmax(student), softmax(teacher), reduction='batchmean')
    loss = jnp.sum(kl_rows) / B

    # Memory-bank updates (stateful side effects in PyTorch; do not affect the
    # returned loss because the banks are "cloned" before the update).  The
    # bank buffers are donated, so these are in-place row-slab writes:
    # ids = (arange(B)+index) % K is a contiguous slab with at most one wrap.
    idx = index % Kq
    n1 = min(B, Kq - idx)
    new_tm = lax.dynamic_update_slice(
        teacher_memory, t_n[:n1].astype(teacher_memory.dtype), (idx, 0))
    new_sm = lax.dynamic_update_slice(
        student_memory, sk_n[:n1].astype(student_memory.dtype), (idx, 0))
    if n1 < B:  # queue wrap-around
        new_tm = lax.dynamic_update_slice(
            new_tm, t_n[n1:].astype(teacher_memory.dtype), (0, 0))
        new_sm = lax.dynamic_update_slice(
            new_sm, sk_n[n1:].astype(student_memory.dtype), (0, 0))
    new_index = (index + B) % Kq

    return loss, new_tm, new_sm, new_index


if __name__ == "__main__":
    key = jax.random.PRNGKey(0)
    B, Dt, Ds, Kq, T = 8, 32, 16, 512, 0.04
    k1, k2, k3, k4, k5 = jax.random.split(key, 5)

    teacher_feats = jax.random.normal(k1, (B, Dt), jnp.float32)
    student_feats = jax.random.normal(k2, (B, Ds), jnp.float32)
    student_feats_key = jax.random.normal(k3, (B, Ds), jnp.float32)

    # register_buffer('memory', torch.rand(K, D)*2*stdv - stdv), stdv = 1/sqrt(D/3)
    stdv_t = 1.0 / math.sqrt(Dt / 3)
    stdv_s = 1.0 / math.sqrt(Ds / 3)
    teacher_memory = jax.random.uniform(k4, (Kq, Dt), jnp.float32) * (2 * stdv_t) - stdv_t
    student_memory = jax.random.uniform(k5, (Kq, Ds), jnp.float32) * (2 * stdv_s) - stdv_s

    # Keep copies: the bank buffers passed to the kernel are donated.
    tm_copy = teacher_memory + 0.0
    sm_copy = student_memory + 0.0

    # Pure-JAX reference (computed BEFORE the call — the bank buffers are donated).
    def ref_loss(t, s, tm, sm):
        tn = t / jnp.sqrt(jnp.sum(t * t, axis=1, keepdims=True))
        sn = s / jnp.sqrt(jnp.sum(s * s, axis=1, keepdims=True))
        sim_t = (tn @ tm.T) / T
        sim_s = (sn @ sm.T) / T
        p = jax.nn.softmax(sim_t, axis=1)
        log_p = jax.nn.log_softmax(sim_t, axis=1)
        log_q = jax.nn.log_softmax(sim_s, axis=1)
        return jnp.sum(p * (log_p - log_q)) / t.shape[0]

    expected = jax.block_until_ready(
        ref_loss(teacher_feats, student_feats, teacher_memory, student_memory))
    tn_ref = teacher_feats / jnp.sqrt(
        jnp.sum(teacher_feats * teacher_feats, axis=1, keepdims=True))
    skn_ref = student_feats_key / jnp.sqrt(
        jnp.sum(student_feats_key * student_feats_key, axis=1, keepdims=True))

    # 1) Multi-step online reduction over K (tile_k divides Kq -> unmasked path).
    loss, new_tm, new_sm, new_index = compress_momentum_forward(
        teacher_feats, student_feats, student_feats_key,
        teacher_memory, student_memory,
        T=T, index=0, tile_k=128)

    jax.block_until_ready((loss, new_tm, new_sm))
    assert loss.shape == () and bool(jnp.isfinite(loss))
    assert new_tm.shape == (Kq, Dt) and new_sm.shape == (Kq, Ds)
    assert bool(jnp.allclose(loss, expected, rtol=2e-3, atol=1e-4)), (loss, expected)
    assert int(new_index) == B
    assert bool(jnp.allclose(new_tm[:B], tn_ref, rtol=1e-5, atol=1e-5))
    assert bool(jnp.allclose(new_sm[:B], skn_ref, rtol=1e-5, atol=1e-5))
    assert bool(jnp.allclose(new_tm[B:], tm_copy[B:]))
    assert bool(jnp.allclose(new_sm[B:], sm_copy[B:]))

    # 2) Ragged path: tile_k=192 -> last K tile masks 64 out-of-range columns.
    loss2, _, _, _ = compress_momentum_forward(
        teacher_feats, student_feats, student_feats_key,
        tm_copy, sm_copy, T=T, index=0, tile_k=192)
    jax.block_until_ready(loss2)
    assert bool(jnp.allclose(loss2, expected, rtol=2e-3, atol=1e-4)), (loss2, expected)

    print("KERNEL_OK")
</pallas_src>

<mosaic_0001>
module attributes {stable_mosaic.version = 11 : i64} {
  func.func @kernel(%arg0: i32, %arg1: i32, %arg2: memref<8x32xf32, #tpu.memory_space<vmem>>, %arg3: memref<8x16xf32, #tpu.memory_space<vmem>>, %arg4: memref<128x32xf32, #tpu.memory_space<vmem>>, %arg5: memref<128x16xf32, #tpu.memory_space<vmem>>, %arg6: memref<8x1xf32, #tpu.memory_space<vmem>>, %arg7: memref<8x1xf32, #tpu.memory_space<vmem>>, %arg8: memref<8x1xf32, #tpu.memory_space<vmem>>, %arg9: memref<8x1xf32, #tpu.memory_space<vmem>>) attributes {dimension_semantics = [#tpu.dimension_semantics<parallel>, #tpu.dimension_semantics<arbitrary>], iteration_bounds = array<i64: 1, 4>, scalar_prefetch = 0 : i64, scratch_operands = 3 : i64, tpu.core_type = #tpu.core_type<tc>, window_params = [{transform_indices = @transform_0, window_bounds = array<i64: 8, 32>}, {transform_indices = @transform_1, window_bounds = array<i64: 8, 16>}, {transform_indices = @transform_2, window_bounds = array<i64: 128, 32>}, {transform_indices = @transform_3, window_bounds = array<i64: 128, 16>}, {transform_indices = @transform_4, window_bounds = array<i64: 8, 1>}]} {
    %c0_i32 = arith.constant 0 : i32
    %0 = arith.cmpi eq, %arg1, %c0_i32 : i32
    %1 = arith.extui %0 : i1 to i32
    %c0_i32_0 = arith.constant 0 : i32
    %2 = arith.cmpi ne, %1, %c0_i32_0 : i32
    scf.if %2 {
      %cst_27 = arith.constant 0.000000e+00 : f32
      %35 = vector.broadcast %cst_27 : f32 to vector<8x1xf32>
      %c0_28 = arith.constant 0 : index
      %c0_29 = arith.constant 0 : index
      %36 = vector.load %arg7[%c0_28, %c0_29] : memref<8x1xf32, #tpu.memory_space<vmem>>, vector<8x1xf32>
      tpu.vector_store %arg7[%c0_28, %c0_29], %35 {strides = array<i32>} : memref<8x1xf32, #tpu.memory_space<vmem>>, vector<8x1xf32>,
      %cst_30 = arith.constant 0.000000e+00 : f32
      %37 = vector.broadcast %cst_30 : f32 to vector<8x1xf32>
      %c0_31 = arith.constant 0 : index
      %c0_32 = arith.constant 0 : index
      %38 = vector.load %arg8[%c0_31, %c0_32] : memref<8x1xf32, #tpu.memory_space<vmem>>, vector<8x1xf32>
      tpu.vector_store %arg8[%c0_31, %c0_32], %37 {strides = array<i32>} : memref<8x1xf32, #tpu.memory_space<vmem>>, vector<8x1xf32>,
      %cst_33 = arith.constant 0.000000e+00 : f32
      %39 = vector.broadcast %cst_33 : f32 to vector<8x1xf32>
      %c0_34 = arith.constant 0 : index
      %c0_35 = arith.constant 0 : index
      %40 = vector.load %arg9[%c0_34, %c0_35] : memref<8x1xf32, #tpu.memory_space<vmem>>, vector<8x1xf32>
      tpu.vector_store %arg9[%c0_34, %c0_35], %39 {strides = array<i32>} : memref<8x1xf32, #tpu.memory_space<vmem>>, vector<8x1xf32>,
    } else {
    }
    %c0 = arith.constant 0 : index
    %c0_1 = arith.constant 0 : index
    %3 = vector.load %arg2[%c0, %c0_1] : memref<8x32xf32, #tpu.memory_space<vmem>>, vector<8x32xf32>
    %c0_2 = arith.constant 0 : index
    %c0_3 = arith.constant 0 : index
    %4 = vector.load %arg4[%c0_2, %c0_3] : memref<128x32xf32, #tpu.memory_space<vmem>>, vector<128x32xf32>
    %cst = arith.constant dense<0.000000e+00> : vector<8x128xf32>
    %5 = tpu.matmul %3, %4, %cst {dimension_numbers = #tpu.dot_dimension_numbers<[1], [1], [0], [0], [0, 0, 1, 0], [], []>} : vector<8x32xf32>, vector<128x32xf32>, vector<8x128xf32> -> vector<8x128xf32>
    %c0_4 = arith.constant 0 : index
    %c0_5 = arith.constant 0 : index
    %6 = vector.load %arg3[%c0_4, %c0_5] : memref<8x16xf32, #tpu.memory_space<vmem>>, vector<8x16xf32>
    %c0_6 = arith.constant 0 : index
    %c0_7 = arith.constant 0 : index
    %7 = vector.load %arg5[%c0_6, %c0_7] : memref<128x16xf32, #tpu.memory_space<vmem>>, vector<128x16xf32>
    %cst_8 = arith.constant dense<0.000000e+00> : vector<8x128xf32>
    %8 = tpu.matmul %6, %7, %cst_8 {dimension_numbers = #tpu.dot_dimension_numbers<[1], [1], [0], [0], [0, 0, 1, 0], [], []>} : vector<8x16xf32>, vector<128x16xf32>, vector<8x128xf32> -> vector<8x128xf32>
    %cst_9 = arith.constant 2.500000e+01 : f32
    %9 = vector.broadcast %cst_9 : f32 to vector<8x128xf32>
    %10 = arith.subf %5, %9 : vector<8x128xf32>
    %11 = math.exp %10 : vector<8x128xf32>
    %cst_10 = arith.constant 2.500000e+01 : f32
    %12 = vector.broadcast %cst_10 : f32 to vector<8x128xf32>
    %13 = arith.subf %8, %12 : vector<8x128xf32>
    %14 = math.exp %13 : vector<8x128xf32>
    %c0_11 = arith.constant 0 : index
    %c0_12 = arith.constant 0 : index
    %15 = vector.load %arg7[%c0_11, %c0_12] : memref<8x1xf32, #tpu.memory_space<vmem>>, vector<8x1xf32>
    %cst_13 = arith.constant dense<0.000000e+00> : vector<8xf32>
    %16 = vector.multi_reduction <add>, %11, %cst_13 [1] : vector<8x128xf32> to vector<8xf32>
    %17 = vector.shape_cast %16 : vector<8xf32> to vector<8x1xf32>
    %18 = arith.addf %15, %17 : vector<8x1xf32>
    %c0_14 = arith.constant 0 : index
    %c0_15 = arith.constant 0 : index
    %19 = vector.load %arg7[%c0_14, %c0_15] : memref<8x1xf32, #tpu.memory_space<vmem>>, vector<8x1xf32>
    tpu.vector_store %arg7[%c0_14, %c0_15], %18 {strides = array<i32>} : memref<8x1xf32, #tpu.memory_space<vmem>>, vector<8x1xf32>,
    %c0_16 = arith.constant 0 : index
    %c0_17 = arith.constant 0 : index
    %20 = vector.load %arg8[%c0_16, %c0_17] : memref<8x1xf32, #tpu.memory_space<vmem>>, vector<8x1xf32>
    %21 = arith.subf %5, %8 : vector<8x128xf32>
    %22 = arith.mulf %11, %21 : vector<8x128xf32>
    %cst_18 = arith.constant dense<0.000000e+00> : vector<8xf32>
    %23 = vector.multi_reduction <add>, %22, %cst_18 [1] : vector<8x128xf32> to vector<8xf32>
    %24 = vector.shape_cast %23 : vector<8xf32> to vector<8x1xf32>
    %25 = arith.addf %20, %24 : vector<8x1xf32>
    %c0_19 = arith.constant 0 : index
    %c0_20 = arith.constant 0 : index
    %26 = vector.load %arg8[%c0_19, %c0_20] : memref<8x1xf32, #tpu.memory_space<vmem>>, vector<8x1xf32>
    tpu.vector_store %arg8[%c0_19, %c0_20], %25 {strides = array<i32>} : memref<8x1xf32, #tpu.memory_space<vmem>>, vector<8x1xf32>,
    %c0_21 = arith.constant 0 : index
    %c0_22 = arith.constant 0 : index
    %27 = vector.load %arg9[%c0_21, %c0_22] : memref<8x1xf32, #tpu.memory_space<vmem>>, vector<8x1xf32>
    %cst_23 = arith.constant dense<0.000000e+00> : vector<8xf32>
    %28 = vector.multi_reduction <add>, %14, %cst_23 [1] : vector<8x128xf32> to vector<8xf32>
    %29 = vector.shape_cast %28 : vector<8xf32> to vector<8x1xf32>
    %30 = arith.addf %27, %29 : vector<8x1xf32>
    %c0_24 = arith.constant 0 : index
    %c0_25 = arith.constant 0 : index
    %31 = vector.load %arg9[%c0_24, %c0_25] : memref<8x1xf32, #tpu.memory_space<vmem>>, vector<8x1xf32>
    tpu.vector_store %arg9[%c0_24, %c0_25], %30 {strides = array<i32>} : memref<8x1xf32, #tpu.memory_space<vmem>>, vector<8x1xf32>,
    %c3_i32 = arith.constant 3 : i32
    %32 = arith.cmpi eq, %arg1, %c3_i32 : i32
    %33 = arith.extui %32 : i1 to i32
    %c0_i32_26 = arith.constant 0 : i32
    %34 = arith.cmpi ne, %33, %c0_i32_26 : i32
    scf.if %34 {
      %c0_27 = arith.constant 0 : index
      %c0_28 = arith.constant 0 : index
      %35 = vector.load %arg8[%c0_27, %c0_28] : memref<8x1xf32, #tpu.memory_space<vmem>>, vector<8x1xf32>
      %c0_29 = arith.constant 0 : index
      %c0_30 = arith.constant 0 : index
      %36 = vector.load %arg7[%c0_29, %c0_30] : memref<8x1xf32, #tpu.memory_space<vmem>>, vector<8x1xf32>
      %37 = arith.divf %35, %36 : vector<8x1xf32>
      %c0_31 = arith.constant 0 : index
      %c0_32 = arith.constant 0 : index
      %38 = vector.load %arg7[%c0_31, %c0_32] : memref<8x1xf32, #tpu.memory_space<vmem>>, vector<8x1xf32>
      %39 = math.log %38 : vector<8x1xf32>
      %40 = arith.subf %37, %39 : vector<8x1xf32>
      %c0_33 = arith.constant 0 : index
      %c0_34 = arith.constant 0 : index
      %41 = vector.load %arg9[%c0_33, %c0_34] : memref<8x1xf32, #tpu.memory_space<vmem>>, vector<8x1xf32>
      %42 = math.log %41 : vector<8x1xf32>
      %43 = arith.addf %40, %42 : vector<8x1xf32>
      %c0_35 = arith.constant 0 : index
      %c0_36 = arith.constant 0 : index
      %44 = vector.load %arg6[%c0_35, %c0_36] : memref<8x1xf32, #tpu.memory_space<vmem>>, vector<8x1xf32>
      tpu.vector_store %arg6[%c0_35, %c0_36], %43 {strides = array<i32>} : memref<8x1xf32, #tpu.memory_space<vmem>>, vector<8x1xf32>,
    } else {
    }
    return
  }
  func.func @transform_0(%arg0: i32, %arg1: i32) -> (i32, i32) {
    %c0_i32 = arith.constant 0 : i32
    %c0_i32_0 = arith.constant 0 : i32
    return %arg0, %c0_i32 : i32, i32
  }
  func.func @transform_1(%arg0: i32, %arg1: i32) -> (i32, i32) {
    %c0_i32 = arith.constant 0 : i32
    %c0_i32_0 = arith.constant 0 : i32
    return %arg0, %c0_i32 : i32, i32
  }
  func.func @transform_2(%arg0: i32, %arg1: i32) -> (i32, i32) {
    %c0_i32 = arith.constant 0 : i32
    %c0_i32_0 = arith.constant 0 : i32
    return %arg1, %c0_i32 : i32, i32
  }
  func.func @transform_3(%arg0: i32, %arg1: i32) -> (i32, i32) {
    %c0_i32 = arith.constant 0 : i32
    %c0_i32_0 = arith.constant 0 : i32
    return %arg1, %c0_i32 : i32, i32
  }
  func.func @transform_4(%arg0: i32, %arg1: i32) -> (i32, i32) {
    %c0_i32 = arith.constant 0 : i32
    %c0_i32_0 = arith.constant 0 : i32
    return %arg0, %c0_i32 : i32, i32
  }
}

</mosaic_0001>

<llo_original>
// kernel: compress_momentum_forward.1
$region0: #{compress_momentum_forward.1}
  #allocation0 [shape = 'u32[]', space=smem, size = 0x4, offset = 0x4, fixed_abs, tag = 'smem constant byte address 0x4 - core index']
  #allocation1 [shape = 'u32[144,128]{1,0:T(1,128)}', space=vmem, size = 0x12000, scoped, tag = 'internal scratch']
  #allocation2 [shape = 'f32[8,1]{1,0:T(8,128)}', space=vmem, size = 0x1000, scoped, tag = 'scratch operand']
  #allocation3 [shape = 'f32[8,1]{1,0:T(8,128)}', space=vmem, size = 0x1000, scoped, tag = 'scratch operand']
  #allocation4 [shape = 'f32[8,1]{1,0:T(8,128)}', space=vmem, size = 0x1000, scoped, tag = 'scratch operand']
  %s0 = inlined_call_operand.vmem [shape: f32[8,32], index: 0, kind: input, shape index: {}]
  %s1 = inlined_call_operand.vmem [shape: f32[8,16], index: 1, kind: input, shape index: {}]
  %s2 = inlined_call_operand.vmem [shape: f32[512,32], index: 2, kind: input, shape index: {}]
  %s3 = inlined_call_operand.vmem [shape: f32[512,16], index: 3, kind: input, shape index: {}]
  %s4 = inlined_call_operand.vmem [shape: f32[8,1], index: 4, kind: output, shape index: {}]
  %s5 = sld [smem:[#allocation0]]
  $region57: #{compress_momentum_forward.1} parent=0
    _
  %s7 = ssub.s32 1, %s5
  %s8 = scalar_select 0, %s7, %s5
  loop: start=0, step=1, limit=6
  $region2: #{compress_momentum_forward.1} parent=0 // loop_pre_header
    _
  $region3: #{compress_momentum_forward.1} parent=0 // loop_header
    %s10 = sphi 0, %s14
    %p11 = scmp.ge.s32.totalorder %s10, 6
    %s17 = sphi 0, %s29
    %s18 = sphi 0, %s25
    %s19 = sphi 0, %s17
    %s20 = sphi 0, %s18
    %s21 = sphi 0, %s19
    %s22 = sphi 0, %s20
    %s32 = sphi 0, %s34
    %s35 = sphi 0, %s32
    %s36 = sphi 0, %s35
    %s52 = sphi 0, %s36
    %s58 = sphi 0, %s60
    %s61 = sphi 0, %s58
    %s62 = sphi 0, %s61
    %s78 = sphi 0, %s62
    %s84 = sphi 0, %s86
    %s87 = sphi 0, %s84
    %s88 = sphi 0, %s87
    %s104 = sphi 0, %s88
    %s110 = sphi 0, %s112
    %s113 = sphi 0, %s110
    %s114 = sphi 0, %s113
    %s130 = sphi 0, %s114
    %s136 = sphi 0, %s138
    %s139 = sphi 0, %s136
    %s140 = sphi 0, %s139
    %s156 = sphi 0, %s140
  $region4: #{compress_momentum_forward.1} parent=0 // loop_header_branch
    %13 = sbr.rel (%p11) target = $region8
  $region5: #{compress_momentum_forward.1} parent=0 // loop_body
    %s15 = ssub.s32 %s10, 1
    %s16 = ssub.s32 %s10, 2
    %s23 = sadd.s32 1, %s18
    %p24 = scmp.ge.s32.totalorder %s23, 4
    %s25 = scalar_select %p24, 0, %s23
    %s26 = sadd.s32 1, %s17
    %s27 = scalar_select %p24, %s26, %s17
    %p28 = scmp.ge.s32.totalorder %s27, 1
    %s29 = scalar_select %p28, 0, %s27
    %s30 = ssub.s32 %s17, %s29
    %p31 = scmp.eq.s32.totalorder %s30, 0
    %s33 = sadd.s32 %s32, 1
    %s34 = scalar_select %p31, %s32, %s33
    %p37 = pneg %p31
    %p38 = scmp.eq.s32.totalorder %s10, 3
    %p39 = por %p37, %p38
    %p40 = scmp.ne.s32.totalorder %s32, %s35
    %p41 = scmp.eq.s32.totalorder %s10, 0
    %p42 = por %p40, %p41
    %p43 = scmp.ne.s32.totalorder %s32, %s35
    %p44 = scmp.eq.s32.totalorder %s15, 3
    %p45 = por %p43, %p44
    %p46 = scmp.ne.s32.totalorder %s35, %s36
    %p47 = scmp.eq.s32.totalorder %s15, 0
    %p48 = por %p46, %p47
    %p49 = scmp.ne.s32.totalorder %s35, %s36
    %p50 = scmp.eq.s32.totalorder %s16, 3
    %p51 = por %p49, %p50
    %p53 = scmp.ne.s32.totalorder %s36, %s52
    %p54 = scmp.eq.s32.totalorder %s16, 0
    %p55 = por %p53, %p54
    %s56 = ssub.s32 %s17, %s29
    %p57 = scmp.eq.s32.totalorder %s56, 0
    %s59 = sadd.s32 %s58, 1
    %s60 = scalar_select %p57, %s58, %s59
    %p63 = pneg %p57
    %p64 = scmp.eq.s32.totalorder %s10, 3
    %p65 = por %p63, %p64
    %p66 = scmp.ne.s32.totalorder %s58, %s61
    %p67 = scmp.eq.s32.totalorder %s10, 0
    %p68 = por %p66, %p67
    %p69 = scmp.ne.s32.totalorder %s58, %s61
    %p70 = scmp.eq.s32.totalorder %s15, 3
    %p71 = por %p69, %p70
    %p72 = scmp.ne.s32.totalorder %s61, %s62
    %p73 = scmp.eq.s32.totalorder %s15, 0
    %p74 = por %p72, %p73
    %p75 = scmp.ne.s32.totalorder %s61, %s62
    %p76 = scmp.eq.s32.totalorder %s16, 3
    %p77 = por %p75, %p76
    %p79 = scmp.ne.s32.totalorder %s62, %s78
    %p80 = scmp.eq.s32.totalorder %s16, 0
    %p81 = por %p79, %p80
    %s82 = ssub.s32 %s18, %s25
    %p83 = scmp.eq.s32.totalorder %s82, 0
    %s85 = sadd.s32 %s84, 1
    %s86 = scalar_select %p83, %s84, %s85
    %p89 = pneg %p83
    %p90 = scmp.eq.s32.totalorder %s10, 3
    %p91 = por %p89, %p90
    %p92 = scmp.ne.s32.totalorder %s84, %s87
    %p93 = scmp.eq.s32.totalorder %s10, 0
    %p94 = por %p92, %p93
    %p95 = scmp.ne.s32.totalorder %s84, %s87
    %p96 = scmp.eq.s32.totalorder %s15, 3
    %p97 = por %p95, %p96
    %p98 = scmp.ne.s32.totalorder %s87, %s88
    %p99 = scmp.eq.s32.totalorder %s15, 0
    %p100 = por %p98, %p99
    %p101 = scmp.ne.s32.totalorder %s87, %s88
    %p102 = scmp.eq.s32.totalorder %s16, 3
    %p103 = por %p101, %p102
    %p105 = scmp.ne.s32.totalorder %s88, %s104
    %p106 = scmp.eq.s32.totalorder %s16, 0
    %p107 = por %p105, %p106
    %s108 = ssub.s32 %s18, %s25
    %p109 = scmp.eq.s32.totalorder %s108, 0
    %s111 = sadd.s32 %s110, 1
    %s112 = scalar_select %p109, %s110, %s111
    %p115 = pneg %p109
    %p116 = scmp.eq.s32.totalorder %s10, 3
    %p117 = por %p115, %p116
    %p118 = scmp.ne.s32.totalorder %s110, %s113
    %p119 = scmp.eq.s32.totalorder %s10, 0
    %p120 = por %p118, %p119
    %p121 = scmp.ne.s32.totalorder %s110, %s113
    %p122 = scmp.eq.s32.totalorder %s15, 3
    %p123 = por %p121, %p122
    %p124 = scmp.ne.s32.totalorder %s113, %s114
    %p125 = scmp.eq.s32.totalorder %s15, 0
    %p126 = por %p124, %p125
    %p127 = scmp.ne.s32.totalorder %s113, %s114
    %p128 = scmp.eq.s32.totalorder %s16, 3
    %p129 = por %p127, %p128
    %p131 = scmp.ne.s32.totalorder %s114, %s130
    %p132 = scmp.eq.s32.totalorder %s16, 0
    %p133 = por %p131, %p132
    %s134 = ssub.s32 %s17, %s29
    %p135 = scmp.eq.s32.totalorder %s134, 0
    %s137 = sadd.s32 %s136, 1
    %s138 = scalar_select %p135, %s136, %s137
    %p141 = pneg %p135
    %p142 = scmp.eq.s32.totalorder %s10, 3
    %p143 = por %p141, %p142
    %p144 = scmp.ne.s32.totalorder %s136, %s139
    %p145 = scmp.eq.s32.totalorder %s10, 0
    %p146 = por %p144, %p145
    %p147 = scmp.ne.s32.totalorder %s136, %s139
    %p148 = scmp.eq.s32.totalorder %s15, 3
    %p149 = por %p147, %p148
    %p150 = scmp.ne.s32.totalorder %s139, %s140
    %p151 = scmp.eq.s32.totalorder %s15, 0
    %p152 = por %p150, %p151
    %p153 = scmp.ne.s32.totalorder %s139, %s140
    %p154 = scmp.eq.s32.totalorder %s16, 3
    %p155 = por %p153, %p154
    %p157 = scmp.ne.s32.totalorder %s140, %s156
    %p158 = scmp.eq.s32.totalorder %s16, 0
    %p159 = por %p157, %p158
    %p160 = scmp.le.s32.totalorder 1, %s10
    %p161 = scmp.lt.s32.totalorder %s10, 5
    %p162 = pnand %p160, %p161
    %p163 = pneg %p162
    // Predicated region
    $region9: #{compress_momentum_forward.1} parent=5 // pred_check
      _
    $region10: #{compress_momentum_forward.1} parent=5 // pred_check_branch
      %165 = sbr.rel (%p162) target = $region12
    $region11: #{compress_momentum_forward.1} parent=5 // pred_region
      %s166 = ssub.s32 %s10, 1
      // Predicated region
      $region13: #{compress_momentum_forward.1} parent=11 // pred_check
        %p167 = pneg %p48
      $region14: #{compress_momentum_forward.1} parent=11 // pred_check_branch
        %169 = sbr.rel (%p167) target = $region16
      $region15: #{compress_momentum_forward.1} parent=11 // pred_region
        %p170 = scmp.lt.s32.totalorder %s19, 0
        %s171 = scalar_select %p170, %s19, 0
        %s172 = smul.addr %s171, 8
        %s173 = scalar_lea.vmem %s0, %s172
      $region16: #{compress_momentum_forward.1} parent=11 // pred_fallthru
        _
      // Predicated region
      $region17: #{compress_momentum_forward.1} parent=11 // pred_check
        %p174 = pneg %p74
      $region18: #{compress_momentum_forward.1} parent=11 // pred_check_branch
        %176 = sbr.rel (%p174) target = $region20
      $region19: #{compress_momentum_forward.1} parent=11 // pred_region
        %p177 = scmp.lt.s32.totalorder %s19, 0
        %s178 = scalar_select %p177, %s19, 0
        %s179 = smul.addr %s178, 8
        %s180 = scalar_lea.vmem %s1, %s179
      $region20: #{compress_momentum_forward.1} parent=11 // pred_fallthru
        _
    $region12: #{compress_momentum_forward.1} parent=5 // pred_fallthru
      _
    %p181 = scmp.lt.s32.totalorder %s10, 4
    // Predicated region
    $region21: #{compress_momentum_forward.1} parent=5 // pred_check
      %p182 = pneg %p181
    $region22: #{compress_momentum_forward.1} parent=5 // pred_check_branch
      %184 = sbr.rel (%p182) target = $region24
    $region23: #{compress_momentum_forward.1} parent=5 // pred_region
      // Predicated region
      $region25: #{compress_momentum_forward.1} parent=23 // pred_check
        %p185 = pneg %p94
      $region26: #{compress_momentum_forward.1} parent=23 // pred_check_branch
        %187 = sbr.rel (%p185) target = $region28
      $region27: #{compress_momentum_forward.1} parent=23 // pred_region
        %s188 = smul.u32 16, %s18
        %p189 = scmp.lt.s32.totalorder %s188, 63
        %s190 = scalar_select %p189, %s188, 63
        %s191 = smul.addr %s190, 8
        %s192 = scalar_lea.vmem %s2, %s191
        %s193 = smul.u32 16, %s18
      $region28: #{compress_momentum_forward.1} parent=23 // pred_fallthru
        _
      // Predicated region
      $region29: #{compress_momentum_forward.1} parent=23 // pred_check
        %p194 = pneg %p120
      $region30: #{compress_momentum_forward.1} parent=23 // pred_check_branch
        %196 = sbr.rel (%p194) target = $region32
      $region31: #{compress_momentum_forward.1} parent=23 // pred_region
        %s197 = smul.u32 16, %s18
        %p198 = scmp.lt.s32.totalorder %s197, 63
        %s199 = scalar_select %p198, %s197, 63
        %s200 = smul.addr %s199, 8
        %s201 = scalar_lea.vmem %s3, %s200
        %s202 = smul.u32 16, %s18
      $region32: #{compress_momentum_forward.1} parent=23 // pred_fallthru
        _
    $region24: #{compress_momentum_forward.1} parent=5 // pred_fallthru
      _
    %p203 = scmp.le.s32.totalorder 1, %s10
    %p204 = scmp.lt.s32.totalorder %s10, 5
    %p205 = pnand %p203, %p204
    %p206 = pneg %p205
    // Predicated region
    $region33: #{compress_momentum_forward.1} parent=5 // pred_check
      _
    $region34: #{compress_momentum_forward.1} parent=5 // pred_check_branch
      %208 = sbr.rel (%p205) target = $region36
    $region35: #{compress_momentum_forward.1} parent=5 // pred_region
      %s209 = ssub.s32 %s10, 1
      %p210 = scmp.lt.s32.totalorder %s19, 0
      %s211 = scalar_select %p210, %s19, 0
      %s212 = smul.addr %s211, 8
      %s213 = scalar_lea.vmem %s0, %s212
      %p214 = pneg %p48
      %p215 = pneg %p45
      %p216 = scmp.lt.s32.totalorder %s19, 0
      %s217 = scalar_select %p216, %s19, 0
      %s218 = smul.addr %s217, 8
      %s219 = scalar_lea.vmem %s1, %s218
      %p220 = pneg %p74
      %p221 = pneg %p71
      %s222 = smul.u32 16, %s20
      %p223 = scmp.lt.s32.totalorder %s222, 63
      %s224 = scalar_select %p223, %s222, 63
      %s225 = smul.addr %s224, 8
      %s226 = scalar_lea.vmem %s2, %s225
      %p227 = pneg %p100
      %p228 = pneg %p97
      %s229 = smul.u32 16, %s20
      %p230 = scmp.lt.s32.totalorder %s229, 63
      %s231 = scalar_select %p230, %s229, 63
      %s232 = smul.addr %s231, 8
      %s233 = scalar_lea.vmem %s3, %s232
      %p234 = pneg %p126
      %p235 = pneg %p123
      %p236 = pneg %p152
      %p237 = pneg %p149
      %p238 = scmp.lt.s32.totalorder %s19, 0
      %s239 = scalar_select %p238, %s19, 0
      %s240 = smul.addr %s239, 8
      %s241 = scalar_lea.vmem %s4, %s240
      %p242 = scmp.lt.s32.totalorder %s19, 0
      %s243 = scalar_select %p242, %s19, 0
      %s244 = smul.addr %s243, 8
      %s245 = scalar_lea.vmem %s0, %s244
      %p246 = scmp.lt.s32.totalorder %s19, 0
      %s247 = scalar_select %p246, %s19, 0
      %s248 = smul.addr %s247, 8
      %s249 = scalar_lea.vmem %s1, %s248
      %s250 = smul.u32 16, %s20
      %p251 = scmp.lt.s32.totalorder %s250, 63
      %s252 = scalar_select %p251, %s250, 63
      %s253 = smul.addr %s252, 8
      %s254 = scalar_lea.vmem %s2, %s253
      %s255 = smul.u32 16, %s20
      %s256 = smul.u32 16, %s20
      %p257 = scmp.lt.s32.totalorder %s256, 63
      %s258 = scalar_select %p257, %s256, 63
      %s259 = smul.addr %s258, 8
      %s260 = scalar_lea.vmem %s3, %s259
      %s261 = smul.u32 16, %s20
      %p262 = scmp.lt.s32.totalorder %s19, 0
      %s263 = scalar_select %p262, %s19, 0
      %s264 = smul.addr %s263, 8
      %s265 = scalar_lea.vmem %s4, %s264
      %p266 = scmp.eq.s32.totalorder %s20, 0
      // Predicated region
      $region37: #{compress_momentum_forward.1} parent=35 // pred_check
        %p267 = pneg %p266
      $region38: #{compress_momentum_forward.1} parent=35 // pred_check_branch
        %269 = sbr.rel (%p267) target = $region40
      $region39: #{compress_momentum_forward.1} parent=35 // pred_region
        %vm270 = vcmask 7168
        %271 = vst.msk [vmem:[#allocation2] sm:$0xff] %vm270, 0.0
        %272 = vst.msk [vmem:[#allocation3] sm:$0xff] %vm270, 0.0
        %273 = vst.msk [vmem:[#allocation4] sm:$0xff] %vm270, 0.0
      $region40: #{compress_momentum_forward.1} parent=35 // pred_fallthru
        _
      %v274 = vld [vmem:[%s245] sm:$0xff]
      %v275 = vld [vmem:[%s254] sm:$0xff]
      %v276 = vld [vmem:[%s254 + $0x8] sm:$0xff]
      %v277 = vld [vmem:[%s254 + $0x10] sm:$0xff]
      %v278 = vld [vmem:[%s254 + $0x18] sm:$0xff]
      %v279 = vld [vmem:[%s254 + $0x20] sm:$0xff]
      %v280 = vld [vmem:[%s254 + $0x28] sm:$0xff]
      %v281 = vld [vmem:[%s254 + $0x30] sm:$0xff]
      %v282 = vld [vmem:[%s254 + $0x38] sm:$0xff]
      %v283 = vld [vmem:[%s254 + $0x40] sm:$0xff]
      %v284 = vld [vmem:[%s254 + $0x48] sm:$0xff]
      %v285 = vld [vmem:[%s254 + $0x50] sm:$0xff]
      %v286 = vld [vmem:[%s254 + $0x58] sm:$0xff]
      %v287 = vld [vmem:[%s254 + $0x60] sm:$0xff]
      %v288 = vld [vmem:[%s254 + $0x68] sm:$0xff]
      %v289 = vld [vmem:[%s254 + $0x70] sm:$0xff]
      %v290 = vld [vmem:[%s254 + $0x78] sm:$0xff]
      %vm291 = vcmask 261120
      %v293 = vsel %vm291, %v274, 0
      %v296 = vsel %vm291, %v275, 0
      %v299 = vsel %vm291, %v276, 0
      %v302 = vsel %vm291, %v277, 0
      %v305 = vsel %vm291, %v278, 0
      %v308 = vsel %vm291, %v279, 0
      %v311 = vsel %vm291, %v280, 0
      %v314 = vsel %vm291, %v281, 0
      %v317 = vsel %vm291, %v282, 0
      %v320 = vsel %vm291, %v283, 0
      %v323 = vsel %vm291, %v284, 0
      %v326 = vsel %vm291, %v285, 0
      %v329 = vsel %vm291, %v286, 0
      %v332 = vsel %vm291, %v287, 0
      %v335 = vsel %vm291, %v288, 0
      %v338 = vsel %vm291, %v289, 0
      %v341 = vsel %vm291, %v290, 0
      %343 = vmatprep.subr.mxu0 0.0
      %344 = vmatpush1.xpose.msra.mxu0 %v296
      %345 = vmatprep.subr.mxu0 0.0
      %346 = vmatpush1.xpose.msra.mxu0 %v299
      %347 = vmatprep.subr.mxu0 0.0
      %348 = vmatpush1.xpose.msra.mxu0 %v302
      %349 = vmatprep.subr.mxu0 0.0
      %350 = vmatpush1.xpose.msra.mxu0 %v305
      %351 = vmatprep.subr.mxu0 0.0
      %352 = vmatpush1.xpose.msra.mxu0 %v308
      %353 = vmatprep.subr.mxu0 0.0
      %354 = vmatpush1.xpose.msra.mxu0 %v311
      %355 = vmatprep.subr.mxu0 0.0
      %356 = vmatpush1.xpose.msra.mxu0 %v314
      %357 = vmatprep.subr.mxu0 0.0
      %358 = vmatpush1.xpose.msra.mxu0 %v317
      %359 = vmatprep.subr.mxu0 0.0
      %360 = vmatpush1.xpose.msra.mxu0 %v320
      %361 = vmatprep.subr.mxu0 0.0
      %362 = vmatpush1.xpose.msra.mxu0 %v323
      %363 = vmatprep.subr.mxu0 0.0
      %364 = vmatpush1.xpose.msra.mxu0 %v326
      %365 = vmatprep.subr.mxu0 0.0
      %366 = vmatpush1.xpose.msra.mxu0 %v329
      %367 = vmatprep.subr.mxu0 0.0
      %368 = vmatpush1.xpose.msra.mxu0 %v332
      %369 = vmatprep.subr.mxu0 0.0
      %370 = vmatpush1.xpose.msra.mxu0 %v335
      %371 = vmatprep.subr.mxu0 0.0
      %372 = vmatpush1.xpose.msra.mxu0 %v338
      %373 = vmatprep.subr.mxu0 0.0
      %374 = vmatpush1.xpose.msra.mxu0 %v341
      %375 = vmatprep.subr.mxu0 0.0
      %376 = vmatpush1.xpose.msra.mxu0 0.0
      %377 = vmatprep.subr.mxu0 0.0
      %378 = vmatpush1.xpose.msra.mxu0 0.0
      %379 = vmatprep.subr.mxu0 0.0
      %380 = vmatpush1.xpose.msra.mxu0 0.0
      %381 = vmatprep.subr.mxu0 0.0
      %382 = vmatpush1.xpose.msra.mxu0 0.0
      %383 = vmatprep.subr.mxu0 0.0
      %384 = vmatpush1.xpose.msra.mxu0 0.0
      %385 = vmatprep.subr.mxu0 0.0
      %386 = vmatpush1.xpose.msra.mxu0 0.0
      %387 = vmatprep.subr.mxu0 0.0
      %388 = vmatpush1.xpose.msra.mxu0 0.0
      %389 = vmatprep.subr.mxu0 0.0
      %390 = vmatpush1.xpose.msra.mxu0 0.0
      %391 = vmatprep.subr.mxu0 0.0
      %392 = vmatpush1.xpose.msra.mxu0 0.0
      %393 = vmatprep.subr.mxu0 0.0
      %394 = vmatpush1.xpose.msra.mxu0 0.0
      %395 = vmatprep.subr.mxu0 0.0
      %396 = vmatpush1.xpose.msra.mxu0 0.0
      %397 = vmatprep.subr.mxu0 0.0
      %398 = vmatpush1.xpose.msra.mxu0 0.0
      %399 = vmatprep.subr.mxu0 0.0
      %400 = vmatpush1.xpose.msra.mxu0 0.0
      %401 = vmatprep.subr.mxu0 0.0
      %402 = vmatpush1.xpose.msra.mxu0 0.0
      %403 = vmatprep.subr.mxu0 0.0
      %404 = vmatpush1.xpose.msra.mxu0 0.0
      %405 = vmatprep.subr.mxu0 0.0
      %406 = vmatpush1.xpose.msra.mxu0 0.0
      %407 = vmatprep.mubr.f32.mxu0 0.0
      %408 = vmatmul.mubr.f32.gmra.mrb[0].mxu0 %v293
      %v409 = vpop.f32.mrb[0].mxu0
      %v410 = vadd.f32 0.0, %v409
      %v411 = vpop.f32.mrb[0].mxu0
      %412 = vdwg.mxu0
      %v413 = vld [vmem:[%s249] sm:$0xff]
      %v414 = vld [vmem:[%s260] sm:$0xff]
      %v415 = vld [vmem:[%s260 + $0x8] sm:$0xff]
      %v416 = vld [vmem:[%s260 + $0x10] sm:$0xff]
      %v417 = vld [vmem:[%s260 + $0x18] sm:$0xff]
      %v418 = vld [vmem:[%s260 + $0x20] sm:$0xff]
      %v419 = vld [vmem:[%s260 + $0x28] sm:$0xff]
      %v420 = vld [vmem:[%s260 + $0x30] sm:$0xff]
      %v421 = vld [vmem:[%s260 + $0x38] sm:$0xff]
      %v422 = vld [vmem:[%s260 + $0x40] sm:$0xff]
      %v423 = vld [vmem:[%s260 + $0x48] sm:$0xff]
      %v424 = vld [vmem:[%s260 + $0x50] sm:$0xff]
      %v425 = vld [vmem:[%s260 + $0x58] sm:$0xff]
      %v426 = vld [vmem:[%s260 + $0x60] sm:$0xff]
      %v427 = vld [vmem:[%s260 + $0x68] sm:$0xff]
      %v428 = vld [vmem:[%s260 + $0x70] sm:$0xff]
      %v429 = vld [vmem:[%s260 + $0x78] sm:$0xff]
      %vm430 = vcmask 130048
      %v432 = vsel %vm430, %v413, 0
      %v435 = vsel %vm430, %v414, 0
      %v438 = vsel %vm430, %v415, 0
      %v441 = vsel %vm430, %v416, 0
      %v444 = vsel %vm430, %v417, 0
      %v447 = vsel %vm430, %v418, 0
      %v450 = vsel %vm430, %v419, 0
      %v453 = vsel %vm430, %v420, 0
      %v456 = vsel %vm430, %v421, 0
      %v459 = vsel %vm430, %v422, 0
      %v462 = vsel %vm430, %v423, 0
      %v465 = vsel %vm430, %v424, 0
      %v468 = vsel %vm430, %v425, 0
      %v471 = vsel %vm430, %v426, 0
      %v474 = vsel %vm430, %v427, 0
      %v477 = vsel %vm430, %v428, 0
      %v480 = vsel %vm430, %v429, 0
      %482 = vmatprep.subr.mxu0 0.0
      %483 = vmatpush1.xpose.msra.mxu0 %v435
      %484 = vmatprep.subr.mxu0 0.0
      %485 = vmatpush1.xpose.msra.mxu0 %v438
      %486 = vmatprep.subr.mxu0 0.0
      %487 = vmatpush1.xpose.msra.mxu0 %v441
      %488 = vmatprep.subr.mxu0 0.0
      %489 = vmatpush1.xpose.msra.mxu0 %v444
      %490 = vmatprep.subr.mxu0 0.0
      %491 = vmatpush1.xpose.msra.mxu0 %v447
      %492 = vmatprep.subr.mxu0 0.0
      %493 = vmatpush1.xpose.msra.mxu0 %v450
      %494 = vmatprep.subr.mxu0 0.0
      %495 = vmatpush1.xpose.msra.mxu0 %v453
      %496 = vmatprep.subr.mxu0 0.0
      %497 = vmatpush1.xpose.msra.mxu0 %v456
      %498 = vmatprep.subr.mxu0 0.0
      %499 = vmatpush1.xpose.msra.mxu0 %v459
      %500 = vmatprep.subr.mxu0 0.0
      %501 = vmatpush1.xpose.msra.mxu0 %v462
      %502 = vmatprep.subr.mxu0 0.0
      %503 = vmatpush1.xpose.msra.mxu0 %v465
      %504 = vmatprep.subr.mxu0 0.0
      %505 = vmatpush1.xpose.msra.mxu0 %v468
      %506 = vmatprep.subr.mxu0 0.0
      %507 = vmatpush1.xpose.msra.mxu0 %v471
      %508 = vmatprep.subr.mxu0 0.0
      %509 = vmatpush1.xpose.msra.mxu0 %v474
      %510 = vmatprep.subr.mxu0 0.0
      %511 = vmatpush1.xpose.msra.mxu0 %v477
      %512 = vmatprep.subr.mxu0 0.0
      %513 = vmatpush1.xpose.msra.mxu0 %v480
      %514 = vmatprep.subr.mxu0 0.0
      %515 = vmatpush1.xpose.msra.mxu0 0.0
      %516 = vmatprep.subr.mxu0 0.0
      %517 = vmatpush1.xpose.msra.mxu0 0.0
      %518 = vmatprep.subr.mxu0 0.0
      %519 = vmatpush1.xpose.msra.mxu0 0.0
      %520 = vmatprep.subr.mxu0 0.0
      %521 = vmatpush1.xpose.msra.mxu0 0.0
      %522 = vmatprep.subr.mxu0 0.0
      %523 = vmatpush1.xpose.msra.mxu0 0.0
      %524 = vmatprep.subr.mxu0 0.0
      %525 = vmatpush1.xpose.msra.mxu0 0.0
      %526 = vmatprep.subr.mxu0 0.0
      %527 = vmatpush1.xpose.msra.mxu0 0.0
      %528 = vmatprep.subr.mxu0 0.0
      %529 = vmatpush1.xpose.msra.mxu0 0.0
      %530 = vmatprep.subr.mxu0 0.0
      %531 = vmatpush1.xpose.msra.mxu0 0.0
      %532 = vmatprep.subr.mxu0 0.0
      %533 = vmatpush1.xpose.msra.mxu0 0.0
      %534 = vmatprep.subr.mxu0 0.0
      %535 = vmatpush1.xpose.msra.mxu0 0.0
      %536 = vmatprep.subr.mxu0 0.0
      %537 = vmatpush1.xpose.msra.mxu0 0.0
      %538 = vmatprep.subr.mxu0 0.0
      %539 = vmatpush1.xpose.msra.mxu0 0.0
      %540 = vmatprep.subr.mxu0 0.0
      %541 = vmatpush1.xpose.msra.mxu0 0.0
      %542 = vmatprep.subr.mxu0 0.0
      %543 = vmatpush1.xpose.msra.mxu0 0.0
      %544 = vmatprep.subr.mxu0 0.0
      %545 = vmatpush1.xpose.msra.mxu0 0.0
      %546 = vmatprep.mubr.f32.mxu0 0.0
      %547 = vmatmul.mubr.f32.gmra.mrb[0].mxu0 %v432
      %v548 = vpop.f32.mrb[0].mxu0
      %v549 = vadd.f32 0.0, %v548
      %v550 = vpop.f32.mrb[0].mxu0
      %551 = vdwg.mxu0
      %v552 = vsub.f32 %v410, 25.0
      %v553 = vmul.f32 %v552, 1.442695
      %v554 = vpow.pop %v553
      %v555 = vsub.f32 %v549, 25.0
      %v556 = vmul.f32 %v555, 1.442695
      %v557 = vpow.pop %v556
      %v558 = vld [vmem:[#allocation2] sm:$0xff]
      %559 = vadd.xlane.f32.xlu0 %v554
      %v560 = vpop.xlane.xlu0 %559
      %v561 = vadd.f32 %v558, %v560
      %vm562 = vcmask 7168
      %563 = vst.msk [vmem:[#allocation2] sm:$0xff] %vm562, %v561
      %v564 = vld [vmem:[#allocation3] sm:$0xff]
      %v565 = vsub.f32 %v410, %v549
      %v566 = vmul.f32 %v554, %v565
      %567 = vadd.xlane.f32.xlu0 %v566
      %v568 = vpop.xlane.xlu0 %567
      %v569 = vadd.f32 %v564, %v568
      %570 = vst.msk [vmem:[#allocation3] sm:$0xff] %vm562, %v569
      %v571 = vld [vmem:[#allocation4] sm:$0xff]
      %572 = vadd.xlane.f32.xlu0 %v557
      %v573 = vpop.xlane.xlu0 %572
      %v574 = vadd.f32 %v571, %v573
      %575 = vst.msk [vmem:[#allocation4] sm:$0xff] %vm562, %v574
      %p576 = scmp.eq.s32.totalorder %s20, 3
      // Predicated region
      $region41: #{compress_momentum_forward.1} parent=35 // pred_check
        %p577 = pneg %p576
      $region42: #{compress_momentum_forward.1} parent=35 // pred_check_branch
        %579 = sbr.rel (%p577) target = $region44
      $region43: #{compress_momentum_forward.1} parent=35 // pred_region
        %v580 = vld [vmem:[#allocation3] sm:$0xff]
        %v581 = vld [vmem:[#allocation2] sm:$0xff]
        %v582 = vrcp.pop %v581
        %v583 = vmul.f32 %v580, %v582
        %v584 = vlog2.pop %v581
        %v585 = vmul.f32 %v584, 0.6931472
        %v586 = vsub.f32 %v583, %v585
        %v587 = vld [vmem:[#allocation4] sm:$0xff]
        %v588 = vlog2.pop %v587
        %v589 = vmul.f32 %v588, 0.6931472
        %v590 = vadd.f32 %v586, %v589
        %591 = vst.msk [vmem:[%s265] sm:$0xff] %vm562, %v590
      $region44: #{compress_momentum_forward.1} parent=35 // pred_fallthru
        _
      %p592 = scmp.lt.s32.totalorder %s19, 0
      %s593 = scalar_select %p592, %s19, 0
      %s594 = smul.addr %s593, 8
      %s595 = scalar_lea.vmem %s4, %s594
      // Predicated region
      $region45: #{compress_momentum_forward.1} parent=35 // pred_check
        %p596 = pneg %p149
      $region46: #{compress_momentum_forward.1} parent=35 // pred_check_branch
        %598 = sbr.rel (%p596) target = $region48
      $region47: #{compress_momentum_forward.1} parent=35 // pred_region
        _
      $region48: #{compress_momentum_forward.1} parent=35 // pred_fallthru
        _
      // Predicated region
      $region49: #{compress_momentum_forward.1} parent=35 // pred_check
        %p599 = pneg %p149
      $region50: #{compress_momentum_forward.1} parent=35 // pred_check_branch
        %601 = sbr.rel (%p599) target = $region52
      $region51: #{compress_momentum_forward.1} parent=35 // pred_region
        %p602 = scmp.lt.s32.totalorder %s19, 0
        %s603 = scalar_select %p602, %s19, 0
        %s604 = smul.addr %s603, 8
        %s605 = scalar_lea.vmem %s4, %s604
      $region52: #{compress_momentum_forward.1} parent=35 // pred_fallthru
        _
    $region36: #{compress_momentum_forward.1} parent=5 // pred_fallthru
      _
    %p606 = scmp.le.s32.totalorder 2, %s10
    // Predicated region
    $region53: #{compress_momentum_forward.1} parent=5 // pred_check
      %p607 = pneg %p606
    $region54: #{compress_momentum_forward.1} parent=5 // pred_check_branch
      %609 = sbr.rel (%p607) target = $region56
    $region55: #{compress_momentum_forward.1} parent=5 // pred_region
      %s610 = ssub.s32 %s10, 2
    $region56: #{compress_momentum_forward.1} parent=5 // pred_fallthru
      _
  $region6: #{compress_momentum_forward.1} parent=0 // loop_footer
    %s14 = sadd.s32 1, %s10
  $region7: #{compress_momentum_forward.1} parent=0 // loop_footer_branch
    %9 = sbr.rel target = $region3
  $region8: #{compress_momentum_forward.1} parent=0 // loop_exit
    _

</llo_original>
